<compile_context>
chip_gen: v7x
topology: tpu7x:2x2x1
jax: 0.10.0
libtpu: 0.0.40
codegen_flags: <defaults>
</compile_context>

<pallas_src>
import jax
import jax.numpy as jnp
from jax.experimental import pallas as pl
from jax.experimental.pallas import tpu as pltpu


def _round_up(x: int, m: int) -> int:
    return (x + m - 1) // m * m


def _cdiv(a: int, b: int) -> int:
    return (a + b - 1) // b


def _pad2(a, rows, cols):
    return jnp.pad(a, ((0, rows - a.shape[0]), (0, cols - a.shape[1])))


def diayn_kernel(obs_ref, w1_ref, b1_ref, w2_ref, b2_ref, w3_ref, b3_ref,
                 out_ref):
    # Cast obs tile on the VPU (avoids a wrapper-side astype pass over HBM).
    x = obs_ref[...].astype(w1_ref.dtype)                        # (bt, obs_dim)

    # Layer 1: MXU matmul with f32 accumulation; bias add + ReLU in f32.
    h = jnp.dot(x, w1_ref[...], preferred_element_type=jnp.float32)
    h = jnp.maximum(h + b1_ref[...], 0.0).astype(w2_ref.dtype)

    # Layer 2
    h = jnp.dot(h, w2_ref[...], preferred_element_type=jnp.float32)
    h = jnp.maximum(h + b2_ref[...], 0.0).astype(w3_ref.dtype)

    # Layer 3 (no activation)
    o = jnp.dot(h, w3_ref[...], preferred_element_type=jnp.float32)
    out_ref[...] = (o + b3_ref[...]).astype(out_ref.dtype)


def prepare_diayn_params(params, compute_dtype=jnp.bfloat16):
    """One-time weight preparation: 128-lane pad + optional cast.

    Call once (e.g. after init / each optimizer step), reuse for every
    forward call.  Weights are cast to `compute_dtype` (bf16 by default:
    native MXU dtype on v5e/v6e/v7x, half the HBM/VMEM bytes); biases stay
    f32 so the bias add happens on the f32 accumulator.

    w1 keeps its first dim at obs_dim (unpadded) so obs can be fed to the
    kernel without any wrapper-side padding; the MXU handles the short
    contraction.  Hidden / skill dims are padded to multiples of 128 so the
    output is lane-dense.  (At large hidden_dim on v6e/v7x, 256-alignment
    would fill the 256-wide MXU better; 128 is optimal for v5e and for the
    mem-bound regime here.)
    """
    w1, b1, w2, b2, w3, b3 = (params["w1"], params["b1"], params["w2"],
                              params["b2"], params["w3"], params["b3"])
    obs_dim, hidden_dim = w1.shape
    skill_dim = w3.shape[1]
    hid_p = _round_up(hidden_dim, 128)
    skl_p = _round_up(skill_dim, 128)

    cd = compute_dtype if compute_dtype is not None else w1.dtype
    return {
        "w1": _pad2(w1.astype(cd), obs_dim, hid_p),      # (obs_dim, hid_p)
        "w2": _pad2(w2.astype(cd), hid_p, hid_p),        # (hid_p,  hid_p)
        "w3": _pad2(w3.astype(cd), hid_p, skl_p),        # (hid_p,  skl_p)
        "b1": _pad2(b1.reshape(1, -1).astype(jnp.float32), 1, hid_p),
        "b2": _pad2(b2.reshape(1, -1).astype(jnp.float32), 1, hid_p),
        "b3": _pad2(b3.reshape(1, -1).astype(jnp.float32), 1, skl_p),
        "obs_dim": obs_dim,
        "hidden_dim": hidden_dim,
        "skill_dim": skill_dim,
        "hid_p": hid_p,
        "skl_p": skl_p,
    }


def diayn_forward(obs, prepared, *, batch_tile=1024):
    """DIAYN skill-prediction MLP forward pass with a single Pallas kernel.

    `prepared` comes from prepare_diayn_params (padded, possibly bf16 weights).
    obs is consumed as-is: no padding or casting passes in the wrapper.
    """
    B, obs_dim = obs.shape
    assert obs_dim == prepared["obs_dim"], "obs feature dim mismatch"
    hid_p, skl_p = prepared["hid_p"], prepared["skl_p"]
    skill_dim = prepared["skill_dim"]
    out_dtype = obs.dtype

    io_itemsize = jnp.dtype(obs.dtype).itemsize
    w_itemsize = jnp.dtype(prepared["w1"].dtype).itemsize

    # Sublane alignment for the obs/out tiles follows the I/O dtype packing
    # (8 rows for 4-byte, 16 for 2-byte, 32 for 1-byte dtypes).
    sub = 8 * max(1, 4 // io_itemsize)

    # Batch tile: as large as requested (HBM-bound -> bigger is better), but
    # never larger than the (rounded) batch, and capped at ceil(B/2) so the
    # "parallel" grid axis has >= 2 steps when possible -> both v7x TCs busy.
    bt = min(batch_tile, _round_up(B, sub))
    if B > 2 * sub:
        bt = min(bt, _round_up(_cdiv(B, 2), sub))
    bt = max(_round_up(bt, sub), sub)
    grid_steps = _cdiv(B, bt)          # last block may be partial (masked)

    def const_spec(shape):
        # Grid-invariant block -> a single VMEM buffer (no pointless
        # double-buffering; saves VMEM on v7x's 64 MiB as hidden dims grow).
        return pl.BlockSpec(shape, lambda i: (0,) * len(shape),
                            pipeline_mode=pl.Buffered(1))

    weight_bytes = ((obs_dim * hid_p + hid_p * hid_p + hid_p * skl_p) * w_itemsize
                    + (2 * hid_p + skl_p) * 4)
    vmem_need = (2 * bt * obs_dim * io_itemsize     # double-buffered obs tiles
                 + 2 * bt * skl_p * io_itemsize     # double-buffered out tiles
                 + weight_bytes                     # single-buffered weights
                 + 3 * bt * hid_p * 4)              # f32 intermediates
    # Tight limit: working set + small headroom (no 2x / 32 MiB floor hedge).
    vmem_limit = int(vmem_need + (4 << 20))

    flops = 2 * B * (obs_dim * hid_p + hid_p * hid_p + hid_p * skl_p)
    bytes_accessed = (B * obs_dim * io_itemsize
                      + B * skl_p * io_itemsize
                      + weight_bytes)

    out_padded = pl.pallas_call(
        diayn_kernel,
        out_shape=jax.ShapeDtypeStruct((B, skl_p), out_dtype),
        grid_spec=pltpu.PrefetchScalarGridSpec(
            num_scalar_prefetch=0,
            grid=(grid_steps,),
            in_specs=[
                # obs: batch-tiled, feature dim = full array dim (unpadded).
                pl.BlockSpec((bt, obs_dim), lambda i: (i, 0)),
                const_spec((obs_dim, hid_p)),                  # w1
                const_spec((1, hid_p)),                        # b1
                const_spec((hid_p, hid_p)),                    # w2
                const_spec((1, hid_p)),                        # b2
                const_spec((hid_p, skl_p)),                    # w3
                const_spec((1, skl_p)),                        # b3
            ],
            out_specs=pl.BlockSpec((bt, skl_p), lambda i: (i, 0)),
        ),
        compiler_params=pltpu.CompilerParams(
            dimension_semantics=("parallel",),
            vmem_limit_bytes=vmem_limit,
        ),
        cost_estimate=pl.CostEstimate(
            flops=flops, transcendentals=0, bytes_accessed=bytes_accessed),
    )(obs, prepared["w1"], prepared["b1"], prepared["w2"], prepared["b2"],
      prepared["w3"], prepared["b3"])

    # Lane-padding trim only (consumers that tolerate padded output can skip
    # this slice entirely).
    return out_padded[:, :skill_dim]


def init_diayn_params(key, obs_dim, skill_dim, hidden_dim, dtype=jnp.float32):
    """Deterministic synthetic init; weights stored transposed as (in, out)."""
    # TODO(synk): utils.weight_init (orthogonal init) is replaced by a simple
    # deterministic scaled-normal init; it does not affect forward semantics.
    ks = jax.random.split(key, 3)

    def lin(k, fan_in, fan_out):
        w = jax.random.normal(k, (fan_in, fan_out), dtype) / jnp.sqrt(fan_in)
        b = jnp.zeros((fan_out,), dtype)
        return w, b

    w1, b1 = lin(ks[0], obs_dim, hidden_dim)
    w2, b2 = lin(ks[1], hidden_dim, hidden_dim)
    w3, b3 = lin(ks[2], hidden_dim, skill_dim)
    return {"w1": w1, "b1": b1, "w2": w2, "b2": b2, "w3": w3, "b3": b3}


def diayn_reference(obs, params):
    """Pure-JAX reference of the PyTorch forward (correctness check)."""
    h = jnp.maximum(obs @ params["w1"] + params["b1"], 0.0)
    h = jnp.maximum(h @ params["w2"] + params["b2"], 0.0)
    return h @ params["w3"] + params["b3"]


def _rel_err(out, ref):
    return float(jnp.linalg.norm(out - ref) / (jnp.linalg.norm(ref) + 1e-12))


if __name__ == "__main__":
    B, OBS_DIM, SKILL_DIM, HIDDEN_DIM = 8, 24, 16, 32

    key = jax.random.PRNGKey(0)
    k_obs, k_params, k_obs2 = jax.random.split(key, 3)

    obs = jax.random.normal(k_obs, (B, OBS_DIM), jnp.float32)
    params = init_diayn_params(k_params, OBS_DIM, SKILL_DIM, HIDDEN_DIM)
    ref = diayn_reference(obs, params)

    # One-time weight prep (amortized to zero in production): f32 and bf16.
    prep_f32 = prepare_diayn_params(params, compute_dtype=jnp.float32)
    prep_bf16 = prepare_diayn_params(params, compute_dtype=jnp.bfloat16)

    # f32 path (tiny batch -> single grid step).
    out = jax.block_until_ready(diayn_forward(obs, prep_f32))
    assert out.shape == (B, SKILL_DIM)
    assert jnp.allclose(out, ref, atol=1e-5, rtol=1e-5), "f32 mismatch vs reference"

    # Larger, non-tile-aligned batch: multi-step pipelined grid with a partial
    # (masked) final block, exercising both TC sharding and boundary masking.
    B2 = 200
    obs2 = jax.random.normal(k_obs2, (B2, OBS_DIM), jnp.float32)
    ref2 = diayn_reference(obs2, params)
    out2 = jax.block_until_ready(diayn_forward(obs2, prep_f32, batch_tile=64))
    assert out2.shape == (B2, SKILL_DIM)
    assert jnp.allclose(out2, ref2, atol=1e-5, rtol=1e-5), "tiled mismatch vs reference"

    # Default (large-tile) config, f32 compute, 200-row batch -> 2 grid steps.
    out2b = jax.block_until_ready(diayn_forward(obs2, prep_f32))
    assert jnp.allclose(out2b, ref2, atol=1e-5, rtol=1e-5), "default-tile mismatch"

    # bf16 compute path (default weight dtype; accumulation stays f32).
    out_bf16 = jax.block_until_ready(diayn_forward(obs, prep_bf16))
    assert out_bf16.shape == (B, SKILL_DIM)
    assert _rel_err(out_bf16, ref) < 3e-2, "bf16 relative error too large"

    out2_bf16 = jax.block_until_ready(diayn_forward(obs2, prep_bf16))
    assert _rel_err(out2_bf16, ref2) < 3e-2, "bf16 tiled relative error too large"

    print("KERNEL_OK")
</pallas_src>

<mosaic_0001>
module attributes {stable_mosaic.version = 11 : i64} {
  func.func @diayn_kernel(%arg0: i32, %arg1: memref<8x24xf32, #tpu.memory_space<vmem>>, %arg2: memref<24x128xf32, #tpu.memory_space<vmem>>, %arg3: memref<1x128xf32, #tpu.memory_space<vmem>>, %arg4: memref<128x128xf32, #tpu.memory_space<vmem>>, %arg5: memref<1x128xf32, #tpu.memory_space<vmem>>, %arg6: memref<128x128xf32, #tpu.memory_space<vmem>>, %arg7: memref<1x128xf32, #tpu.memory_space<vmem>>, %arg8: memref<8x128xf32, #tpu.memory_space<vmem>>) attributes {dimension_semantics = [#tpu.dimension_semantics<parallel>], iteration_bounds = array<i64: 1>, scalar_prefetch = 0 : i64, scratch_operands = 0 : i64, tpu.core_type = #tpu.core_type<tc>, window_params = [{transform_indices = @transform_0, window_bounds = array<i64: 8, 24>}, {pipeline_mode = #tpu.pipeline_mode<synchronous>, transform_indices = @transform_1, window_bounds = array<i64: 24, 128>}, {pipeline_mode = #tpu.pipeline_mode<synchronous>, transform_indices = @transform_2, window_bounds = array<i64: 1, 128>}, {pipeline_mode = #tpu.pipeline_mode<synchronous>, transform_indices = @transform_3, window_bounds = array<i64: 128, 128>}, {pipeline_mode = #tpu.pipeline_mode<synchronous>, transform_indices = @transform_4, window_bounds = array<i64: 1, 128>}, {pipeline_mode = #tpu.pipeline_mode<synchronous>, transform_indices = @transform_5, window_bounds = array<i64: 128, 128>}, {pipeline_mode = #tpu.pipeline_mode<synchronous>, transform_indices = @transform_6, window_bounds = array<i64: 1, 128>}, {transform_indices = @transform_7, window_bounds = array<i64: 8, 128>}]} {
    %c0 = arith.constant 0 : index
    %c0_0 = arith.constant 0 : index
    %0 = vector.load %arg1[%c0, %c0_0] : memref<8x24xf32, #tpu.memory_space<vmem>>, vector<8x24xf32>
    %c0_1 = arith.constant 0 : index
    %c0_2 = arith.constant 0 : index
    %1 = vector.load %arg2[%c0_1, %c0_2] : memref<24x128xf32, #tpu.memory_space<vmem>>, vector<24x128xf32>
    %cst = arith.constant dense<0.000000e+00> : vector<8x128xf32>
    %2 = tpu.matmul %0, %1, %cst {dimension_numbers = #tpu.dot_dimension_numbers<[1], [0], [0], [1], [0, 0, 1, 1], [], []>} : vector<8x24xf32>, vector<24x128xf32>, vector<8x128xf32> -> vector<8x128xf32>
    %c0_3 = arith.constant 0 : index
    %c0_4 = arith.constant 0 : index
    %3 = vector.load %arg3[%c0_3, %c0_4] : memref<1x128xf32, #tpu.memory_space<vmem>>, vector<1x128xf32>
    %4 = vector.broadcast %3 : vector<1x128xf32> to vector<8x128xf32>
    %5 = arith.addf %2, %4 : vector<8x128xf32>
    %cst_5 = arith.constant 0.000000e+00 : f32
    %6 = vector.broadcast %cst_5 : f32 to vector<8x128xf32>
    %7 = arith.maximumf %5, %6 : vector<8x128xf32>
    %c0_6 = arith.constant 0 : index
    %c0_7 = arith.constant 0 : index
    %8 = vector.load %arg4[%c0_6, %c0_7] : memref<128x128xf32, #tpu.memory_space<vmem>>, vector<128x128xf32>
    %cst_8 = arith.constant dense<0.000000e+00> : vector<8x128xf32>
    %9 = tpu.matmul %7, %8, %cst_8 {dimension_numbers = #tpu.dot_dimension_numbers<[1], [0], [0], [1], [0, 0, 1, 1], [], []>} : vector<8x128xf32>, vector<128x128xf32>, vector<8x128xf32> -> vector<8x128xf32>
    %c0_9 = arith.constant 0 : index
    %c0_10 = arith.constant 0 : index
    %10 = vector.load %arg5[%c0_9, %c0_10] : memref<1x128xf32, #tpu.memory_space<vmem>>, vector<1x128xf32>
    %11 = vector.broadcast %10 : vector<1x128xf32> to vector<8x128xf32>
    %12 = arith.addf %9, %11 : vector<8x128xf32>
    %cst_11 = arith.constant 0.000000e+00 : f32
    %13 = vector.broadcast %cst_11 : f32 to vector<8x128xf32>
    %14 = arith.maximumf %12, %13 : vector<8x128xf32>
    %c0_12 = arith.constant 0 : index
    %c0_13 = arith.constant 0 : index
    %15 = vector.load %arg6[%c0_12, %c0_13] : memref<128x128xf32, #tpu.memory_space<vmem>>, vector<128x128xf32>
    %cst_14 = arith.constant dense<0.000000e+00> : vector<8x128xf32>
    %16 = tpu.matmul %14, %15, %cst_14 {dimension_numbers = #tpu.dot_dimension_numbers<[1], [0], [0], [1], [0, 0, 1, 1], [], []>} : vector<8x128xf32>, vector<128x128xf32>, vector<8x128xf32> -> vector<8x128xf32>
    %c0_15 = arith.constant 0 : index
    %c0_16 = arith.constant 0 : index
    %17 = vector.load %arg7[%c0_15, %c0_16] : memref<1x128xf32, #tpu.memory_space<vmem>>, vector<1x128xf32>
    %18 = vector.broadcast %17 : vector<1x128xf32> to vector<8x128xf32>
    %19 = arith.addf %16, %18 : vector<8x128xf32>
    %c0_17 = arith.constant 0 : index
    %c0_18 = arith.constant 0 : index
    %20 = vector.load %arg8[%c0_17, %c0_18] : memref<8x128xf32, #tpu.memory_space<vmem>>, vector<8x128xf32>
    tpu.vector_store %arg8[%c0_17, %c0_18], %19 {strides = array<i32>} : memref<8x128xf32, #tpu.memory_space<vmem>>, vector<8x128xf32>,
    return
  }
  func.func @transform_0(%arg0: i32) -> (i32, i32) {
    %c0_i32 = arith.constant 0 : i32
    %c0_i32_0 = arith.constant 0 : i32
    return %arg0, %c0_i32 : i32, i32
  }
  func.func @transform_1(%arg0: i32) -> (i32, i32) {
    %c0_i32 = arith.constant 0 : i32
    %c0_i32_0 = arith.constant 0 : i32
    %c0_i32_1 = arith.constant 0 : i32
    return %c0_i32, %c0_i32_0 : i32, i32
  }
  func.func @transform_2(%arg0: i32) -> (i32, i32) {
    %c0_i32 = arith.constant 0 : i32
    %c0_i32_0 = arith.constant 0 : i32
    %c0_i32_1 = arith.constant 0 : i32
    return %c0_i32, %c0_i32_0 : i32, i32
  }
  func.func @transform_3(%arg0: i32) -> (i32, i32) {
    %c0_i32 = arith.constant 0 : i32
    %c0_i32_0 = arith.constant 0 : i32
    %c0_i32_1 = arith.constant 0 : i32
    return %c0_i32, %c0_i32_0 : i32, i32
  }
  func.func @transform_4(%arg0: i32) -> (i32, i32) {
    %c0_i32 = arith.constant 0 : i32
    %c0_i32_0 = arith.constant 0 : i32
    %c0_i32_1 = arith.constant 0 : i32
    return %c0_i32, %c0_i32_0 : i32, i32
  }
  func.func @transform_5(%arg0: i32) -> (i32, i32) {
    %c0_i32 = arith.constant 0 : i32
    %c0_i32_0 = arith.constant 0 : i32
    %c0_i32_1 = arith.constant 0 : i32
    return %c0_i32, %c0_i32_0 : i32, i32
  }
  func.func @transform_6(%arg0: i32) -> (i32, i32) {
    %c0_i32 = arith.constant 0 : i32
    %c0_i32_0 = arith.constant 0 : i32
    %c0_i32_1 = arith.constant 0 : i32
    return %c0_i32, %c0_i32_0 : i32, i32
  }
  func.func @transform_7(%arg0: i32) -> (i32, i32) {
    %c0_i32 = arith.constant 0 : i32
    %c0_i32_0 = arith.constant 0 : i32
    return %arg0, %c0_i32 : i32, i32
  }
}

</mosaic_0001>

<llo_original>
// kernel: tpu_custom_call.1
$region0: #{tpu_custom_call.1}
  #allocation0 [shape = 'u32[]', space=smem, size = 0x4, offset = 0x4, fixed_abs, tag = 'smem constant byte address 0x4 - core index']
  #allocation1 [shape = 'u32[144,128]{1,0:T(1,128)}', space=vmem, size = 0x12000, scoped, tag = 'internal scratch']
  %s0 = inlined_call_operand.hbm [shape: f32[8,24], index: 0, kind: input, shape index: {}]
  %s1 = inlined_call_operand.hbm [shape: f32[24,128], index: 1, kind: input, shape index: {}]
  %s2 = inlined_call_operand.vmem [shape: f32[1,128], index: 2, kind: input, shape index: {}]
  %s3 = inlined_call_operand.hbm [shape: f32[128,128], index: 3, kind: input, shape index: {}]
  %s4 = inlined_call_operand.vmem [shape: f32[1,128], index: 4, kind: input, shape index: {}]
  %s5 = inlined_call_operand.hbm [shape: f32[128,128], index: 5, kind: input, shape index: {}]
  %s6 = inlined_call_operand.vmem [shape: f32[1,128], index: 6, kind: input, shape index: {}]
  %s7 = inlined_call_operand.hbm [shape: f32[8,128], index: 7, kind: output, shape index: {}]
  %s8 = sld [smem:[#allocation0]]
  $region54: #{tpu_custom_call.1} parent=0
    _
  %s10 = ssub.s32 1, %s8
  %s11 = scalar_select 0, %s10, %s8
  $region1: #{tpu_custom_call.1} parent=0
    #allocation2 [shape = 'u8[4096]{0}', space=vmem, size = 0x1000, scoped, tag = 'input window, operand 0, single buffered']
    #allocation3 [shape = 's32[1]{0}', space=sflag, size = 0x4, scoped, tag = 'scoped memory for tpu_custom_call.1']
    #allocation4 [shape = 's32[1]{0}', space=sflag, size = 0x4, scoped, tag = 'scoped memory for tpu_custom_call.1']
    #allocation5 [shape = 'u8[12288]{0}', space=vmem, size = 0x3000, scoped, tag = 'input window, operand 1, single buffered']
    #allocation6 [shape = 's32[1]{0}', space=sflag, size = 0x4, scoped, tag = 'scoped memory for tpu_custom_call.1']
    #allocation7 [shape = 'u8[65536]{0}', space=vmem, size = 0x10000, scoped, tag = 'input window, operand 3, single buffered']
    #allocation8 [shape = 'u8[65536]{0}', space=vmem, size = 0x10000, scoped, tag = 'input window, operand 5, single buffered']
    #allocation9 [shape = 's32[1]{0}', space=sflag, size = 0x4, scoped, tag = 'scoped memory for tpu_custom_call.1']
    #allocation10 [shape = 'u8[4096]{0}', space=vmem, size = 0x1000, scoped, tag = 'output window, operand 0, single buffered']
    %12 = vsyncpa [#allocation3], 0
    %13 = vsyncpa [#allocation6], 0
    %14 = vsyncpa [#allocation9], 0
    %15 = vsyncpa [#allocation4], 0
    // Predicated region
    $region2: #{tpu_custom_call.1} parent=1 // pred_check
      _
    $region3: #{tpu_custom_call.1} parent=1 // pred_check_branch
      %17 = sbr.rel (0) target = $region5
    $region4: #{tpu_custom_call.1} parent=1 // pred_region
      %s19 = ssub.s32 128, 128
      %20 = vsyncadd [#allocation3], %s19
      %s22 = sshll.u32 [#allocation2], 4
      %s23 = int_to_ptr.vmem [resolvable:$true] %s22
      %25 = dma.hbm_to_vmem [thread:$0]  %s0, 128, %s23, [#allocation3]
    $region5: #{tpu_custom_call.1} parent=1 // pred_fallthru
      _
    // Predicated region
    $region6: #{tpu_custom_call.1} parent=1 // pred_check
      _
    $region7: #{tpu_custom_call.1} parent=1 // pred_check_branch
      %27 = sbr.rel (0) target = $region9
    $region8: #{tpu_custom_call.1} parent=1 // pred_region
      %s29 = ssub.s32 384, 384
      %30 = vsyncadd [#allocation6], %s29
      %s31 = sshll.u32 [#allocation5], 4
      %s32 = int_to_ptr.vmem [resolvable:$true] %s31
      %37 = dma.hbm_to_vmem [thread:$0]  %s1, 384, %s32, [#allocation6], 128, 128, 8
    $region9: #{tpu_custom_call.1} parent=1 // pred_fallthru
      _
    // Predicated region
    $region10: #{tpu_custom_call.1} parent=1 // pred_check
      _
    $region11: #{tpu_custom_call.1} parent=1 // pred_check_branch
      %39 = sbr.rel (0) target = $region13
    $region12: #{tpu_custom_call.1} parent=1 // pred_region
      _
    $region13: #{tpu_custom_call.1} parent=1 // pred_fallthru
      _
    // Predicated region
    $region14: #{tpu_custom_call.1} parent=1 // pred_check
      _
    $region15: #{tpu_custom_call.1} parent=1 // pred_check_branch
      %41 = sbr.rel (0) target = $region17
    $region16: #{tpu_custom_call.1} parent=1 // pred_region
      %s43 = ssub.s32 2048, 2048
      %44 = vsyncadd [#allocation6], %s43
      %s45 = sshll.u32 [#allocation7], 4
      %s46 = int_to_ptr.vmem [resolvable:$true] %s45
      %51 = dma.hbm_to_vmem [thread:$0]  %s3, 2048, %s46, [#allocation6], 128, 128, 8
    $region17: #{tpu_custom_call.1} parent=1 // pred_fallthru
      _
    // Predicated region
    $region18: #{tpu_custom_call.1} parent=1 // pred_check
      _
    $region19: #{tpu_custom_call.1} parent=1 // pred_check_branch
      %53 = sbr.rel (0) target = $region21
    $region20: #{tpu_custom_call.1} parent=1 // pred_region
      _
    $region21: #{tpu_custom_call.1} parent=1 // pred_fallthru
      _
    // Predicated region
    $region22: #{tpu_custom_call.1} parent=1 // pred_check
      _
    $region23: #{tpu_custom_call.1} parent=1 // pred_check_branch
      %55 = sbr.rel (0) target = $region25
    $region24: #{tpu_custom_call.1} parent=1 // pred_region
      %s57 = ssub.s32 2048, 2048
      %58 = vsyncadd [#allocation9], %s57
      %s59 = sshll.u32 [#allocation8], 4
      %s60 = int_to_ptr.vmem [resolvable:$true] %s59
      %65 = dma.hbm_to_vmem [thread:$0]  %s5, 2048, %s60, [#allocation9], 128, 128, 8
    $region25: #{tpu_custom_call.1} parent=1 // pred_fallthru
      _
    // Predicated region
    $region26: #{tpu_custom_call.1} parent=1 // pred_check
      _
    $region27: #{tpu_custom_call.1} parent=1 // pred_check_branch
      %67 = sbr.rel (0) target = $region29
    $region28: #{tpu_custom_call.1} parent=1 // pred_region
      _
    $region29: #{tpu_custom_call.1} parent=1 // pred_fallthru
      _
    // Predicated region
    $region30: #{tpu_custom_call.1} parent=1 // pred_check
      _
    $region31: #{tpu_custom_call.1} parent=1 // pred_check_branch
      %69 = sbr.rel (0) target = $region33
    $region32: #{tpu_custom_call.1} parent=1 // pred_region
      %70 = dma.done [#allocation3], 128
    $region33: #{tpu_custom_call.1} parent=1 // pred_fallthru
      _
    // Predicated region
    $region34: #{tpu_custom_call.1} parent=1 // pred_check
      _
    $region35: #{tpu_custom_call.1} parent=1 // pred_check_branch
      %72 = sbr.rel (0) target = $region37
    $region36: #{tpu_custom_call.1} parent=1 // pred_region
      %73 = dma.done [#allocation6], 384
    $region37: #{tpu_custom_call.1} parent=1 // pred_fallthru
      _
    // Predicated region
    $region38: #{tpu_custom_call.1} parent=1 // pred_check
      _
    $region39: #{tpu_custom_call.1} parent=1 // pred_check_branch
      %75 = sbr.rel (0) target = $region41
    $region40: #{tpu_custom_call.1} parent=1 // pred_region
      %76 = dma.done [#allocation6], 2048
    $region41: #{tpu_custom_call.1} parent=1 // pred_fallthru
      _
    // Predicated region
    $region42: #{tpu_custom_call.1} parent=1 // pred_check
      _
    $region43: #{tpu_custom_call.1} parent=1 // pred_check_branch
      %78 = sbr.rel (0) target = $region45
    $region44: #{tpu_custom_call.1} parent=1 // pred_region
      %79 = dma.done [#allocation9], 2048
    $region45: #{tpu_custom_call.1} parent=1 // pred_fallthru
      _
    %v80 = vld [vmem:[#allocation2] sm:$0xff]
    %v81 = vld [vmem:[#allocation5] sm:$0xff]
    %v82 = vld [vmem:[#allocation5 + $0x8] sm:$0xff]
    %v83 = vld [vmem:[#allocation5 + $0x10] sm:$0xff]
    %v84 = vld [vmem:[%s2] sm:$0x1]
    %v86 = vlaneseq
    %v87 = vshrl.u32 %v86, 7
    %v88 = vsub.s32 0, %v87
    %v89 = vrot.slane %v84, %v88
    %vm91 = vcmask 195584
    %v93 = vsel %vm91, %v80, 0
    %95 = vmatprep.subr.mxu0 0.0
    %96 = vmatpush1.msra.mxu0 %v81
    %97 = vmatprep.subr.mxu0 0.0
    %98 = vmatpush1.msra.mxu0 %v82
    %99 = vmatprep.subr.mxu0 0.0
    %100 = vmatpush1.msra.mxu0 %v83
    %101 = vmatprep.subr.mxu0 0.0
    %102 = vmatpush1.msra.mxu0 0.0
    %103 = vmatprep.subr.mxu0 0.0
    %104 = vmatpush1.msra.mxu0 0.0
    %105 = vmatprep.subr.mxu0 0.0
    %106 = vmatpush1.msra.mxu0 0.0
    %107 = vmatprep.subr.mxu0 0.0
    %108 = vmatpush1.msra.mxu0 0.0
    %109 = vmatprep.subr.mxu0 0.0
    %110 = vmatpush1.msra.mxu0 0.0
    %111 = vmatprep.subr.mxu0 0.0
    %112 = vmatpush1.msra.mxu0 0.0
    %113 = vmatprep.subr.mxu0 0.0
    %114 = vmatpush1.msra.mxu0 0.0
    %115 = vmatprep.subr.mxu0 0.0
    %116 = vmatpush1.msra.mxu0 0.0
    %117 = vmatprep.subr.mxu0 0.0
    %118 = vmatpush1.msra.mxu0 0.0
    %119 = vmatprep.subr.mxu0 0.0
    %120 = vmatpush1.msra.mxu0 0.0
    %121 = vmatprep.subr.mxu0 0.0
    %122 = vmatpush1.msra.mxu0 0.0
    %123 = vmatprep.subr.mxu0 0.0
    %124 = vmatpush1.msra.mxu0 0.0
    %125 = vmatprep.subr.mxu0 0.0
    %126 = vmatpush1.msra.mxu0 0.0
    %127 = vmatprep.subr.mxu0 0.0
    %128 = vmatpush1.msra.mxu0 0.0
    %129 = vmatprep.subr.mxu0 0.0
    %130 = vmatpush1.msra.mxu0 0.0
    %131 = vmatprep.subr.mxu0 0.0
    %132 = vmatpush1.msra.mxu0 0.0
    %133 = vmatprep.subr.mxu0 0.0
    %134 = vmatpush1.msra.mxu0 0.0
    %135 = vmatprep.subr.mxu0 0.0
    %136 = vmatpush1.msra.mxu0 0.0
    %137 = vmatprep.subr.mxu0 0.0
    %138 = vmatpush1.msra.mxu0 0.0
    %139 = vmatprep.subr.mxu0 0.0
    %140 = vmatpush1.msra.mxu0 0.0
    %141 = vmatprep.subr.mxu0 0.0
    %142 = vmatpush1.msra.mxu0 0.0
    %143 = vmatprep.subr.mxu0 0.0
    %144 = vmatpush1.msra.mxu0 0.0
    %145 = vmatprep.subr.mxu0 0.0
    %146 = vmatpush1.msra.mxu0 0.0
    %147 = vmatprep.subr.mxu0 0.0
    %148 = vmatpush1.msra.mxu0 0.0
    %149 = vmatprep.subr.mxu0 0.0
    %150 = vmatpush1.msra.mxu0 0.0
    %151 = vmatprep.subr.mxu0 0.0
    %152 = vmatpush1.msra.mxu0 0.0
    %153 = vmatprep.subr.mxu0 0.0
    %154 = vmatpush1.msra.mxu0 0.0
    %155 = vmatprep.subr.mxu0 0.0
    %156 = vmatpush1.msra.mxu0 0.0
    %157 = vmatprep.subr.mxu0 0.0
    %158 = vmatpush1.msra.mxu0 0.0
    %159 = vmatprep.mubr.f32.mxu0 0.0
    %160 = vmatmul.mubr.f32.gmra.mrb[0].mxu0 %v93
    %v161 = vpop.f32.mrb[0].mxu0
    %v162 = vadd.f32 %v89, %v161
    %v163 = vpop.f32.mrb[0].mxu0
    %164 = vdwg.mxu0
    %v165 = vmax.f32 %v162, 0.0
    %v166 = vld [vmem:[#allocation7] sm:$0xff]
    %v167 = vld [vmem:[#allocation7 + $0x8] sm:$0xff]
    %v168 = vld [vmem:[#allocation7 + $0x10] sm:$0xff]
    %v169 = vld [vmem:[#allocation7 + $0x18] sm:$0xff]
    %v170 = vld [vmem:[#allocation7 + $0x20] sm:$0xff]
    %v171 = vld [vmem:[#allocation7 + $0x28] sm:$0xff]
    %v172 = vld [vmem:[#allocation7 + $0x30] sm:$0xff]
    %v173 = vld [vmem:[#allocation7 + $0x38] sm:$0xff]
    %v174 = vld [vmem:[#allocation7 + $0x40] sm:$0xff]
    %v175 = vld [vmem:[#allocation7 + $0x48] sm:$0xff]
    %v176 = vld [vmem:[#allocation7 + $0x50] sm:$0xff]
    %v177 = vld [vmem:[#allocation7 + $0x58] sm:$0xff]
    %v178 = vld [vmem:[#allocation7 + $0x60] sm:$0xff]
    %v179 = vld [vmem:[#allocation7 + $0x68] sm:$0xff]
    %v180 = vld [vmem:[#allocation7 + $0x70] sm:$0xff]
    %v181 = vld [vmem:[#allocation7 + $0x78] sm:$0xff]
    %v182 = vld [vmem:[%s4] sm:$0x1]
    %v184 = vlaneseq
    %v185 = vshrl.u32 %v184, 7
    %v186 = vsub.s32 0, %v185
    %v187 = vrot.slane %v182, %v186
    %189 = vmatprep.subr.mxu0 0.0
    %190 = vmatpush1.msra.mxu0 %v166
    %191 = vmatprep.subr.mxu0 0.0
    %192 = vmatpush1.msra.mxu0 %v167
    %193 = vmatprep.subr.mxu0 0.0
    %194 = vmatpush1.msra.mxu0 %v168
    %195 = vmatprep.subr.mxu0 0.0
    %196 = vmatpush1.msra.mxu0 %v169
    %197 = vmatprep.subr.mxu0 0.0
    %198 = vmatpush1.msra.mxu0 %v170
    %199 = vmatprep.subr.mxu0 0.0
    %200 = vmatpush1.msra.mxu0 %v171
    %201 = vmatprep.subr.mxu0 0.0
    %202 = vmatpush1.msra.mxu0 %v172
    %203 = vmatprep.subr.mxu0 0.0
    %204 = vmatpush1.msra.mxu0 %v173
    %205 = vmatprep.subr.mxu0 0.0
    %206 = vmatpush1.msra.mxu0 %v174
    %207 = vmatprep.subr.mxu0 0.0
    %208 = vmatpush1.msra.mxu0 %v175
    %209 = vmatprep.subr.mxu0 0.0
    %210 = vmatpush1.msra.mxu0 %v176
    %211 = vmatprep.subr.mxu0 0.0
    %212 = vmatpush1.msra.mxu0 %v177
    %213 = vmatprep.subr.mxu0 0.0
    %214 = vmatpush1.msra.mxu0 %v178
    %215 = vmatprep.subr.mxu0 0.0
    %216 = vmatpush1.msra.mxu0 %v179
    %217 = vmatprep.subr.mxu0 0.0
    %218 = vmatpush1.msra.mxu0 %v180
    %219 = vmatprep.subr.mxu0 0.0
    %220 = vmatpush1.msra.mxu0 %v181
    %221 = vmatprep.subr.mxu0 0.0
    %222 = vmatpush1.msra.mxu0 0.0
    %223 = vmatprep.subr.mxu0 0.0
    %224 = vmatpush1.msra.mxu0 0.0
    %225 = vmatprep.subr.mxu0 0.0
    %226 = vmatpush1.msra.mxu0 0.0
    %227 = vmatprep.subr.mxu0 0.0
    %228 = vmatpush1.msra.mxu0 0.0
    %229 = vmatprep.subr.mxu0 0.0
    %230 = vmatpush1.msra.mxu0 0.0
    %231 = vmatprep.subr.mxu0 0.0
    %232 = vmatpush1.msra.mxu0 0.0
    %233 = vmatprep.subr.mxu0 0.0
    %234 = vmatpush1.msra.mxu0 0.0
    %235 = vmatprep.subr.mxu0 0.0
    %236 = vmatpush1.msra.mxu0 0.0
    %237 = vmatprep.subr.mxu0 0.0
    %238 = vmatpush1.msra.mxu0 0.0
    %239 = vmatprep.subr.mxu0 0.0
    %240 = vmatpush1.msra.mxu0 0.0
    %241 = vmatprep.subr.mxu0 0.0
    %242 = vmatpush1.msra.mxu0 0.0
    %243 = vmatprep.subr.mxu0 0.0
    %244 = vmatpush1.msra.mxu0 0.0
    %245 = vmatprep.subr.mxu0 0.0
    %246 = vmatpush1.msra.mxu0 0.0
    %247 = vmatprep.subr.mxu0 0.0
    %248 = vmatpush1.msra.mxu0 0.0
    %249 = vmatprep.subr.mxu0 0.0
    %250 = vmatpush1.msra.mxu0 0.0
    %251 = vmatprep.subr.mxu0 0.0
    %252 = vmatpush1.msra.mxu0 0.0
    %253 = vmatprep.mubr.f32.mxu0 0.0
    %254 = vmatmul.mubr.f32.gmra.mrb[0].mxu0 %v165
    %v255 = vpop.f32.mrb[0].mxu0
    %v256 = vadd.f32 %v187, %v255
    %v257 = vpop.f32.mrb[0].mxu0
    %258 = vdwg.mxu0
    %v259 = vmax.f32 %v256, 0.0
    %v260 = vld [vmem:[#allocation8] sm:$0xff]
    %v261 = vld [vmem:[#allocation8 + $0x8] sm:$0xff]
    %v262 = vld [vmem:[#allocation8 + $0x10] sm:$0xff]
    %v263 = vld [vmem:[#allocation8 + $0x18] sm:$0xff]
    %v264 = vld [vmem:[#allocation8 + $0x20] sm:$0xff]
    %v265 = vld [vmem:[#allocation8 + $0x28] sm:$0xff]
    %v266 = vld [vmem:[#allocation8 + $0x30] sm:$0xff]
    %v267 = vld [vmem:[#allocation8 + $0x38] sm:$0xff]
    %v268 = vld [vmem:[#allocation8 + $0x40] sm:$0xff]
    %v269 = vld [vmem:[#allocation8 + $0x48] sm:$0xff]
    %v270 = vld [vmem:[#allocation8 + $0x50] sm:$0xff]
    %v271 = vld [vmem:[#allocation8 + $0x58] sm:$0xff]
    %v272 = vld [vmem:[#allocation8 + $0x60] sm:$0xff]
    %v273 = vld [vmem:[#allocation8 + $0x68] sm:$0xff]
    %v274 = vld [vmem:[#allocation8 + $0x70] sm:$0xff]
    %v275 = vld [vmem:[#allocation8 + $0x78] sm:$0xff]
    %v276 = vld [vmem:[%s6] sm:$0x1]
    %v278 = vlaneseq
    %v279 = vshrl.u32 %v278, 7
    %v280 = vsub.s32 0, %v279
    %v281 = vrot.slane %v276, %v280
    %283 = vmatprep.subr.mxu0 0.0
    %284 = vmatpush1.msra.mxu0 %v260
    %285 = vmatprep.subr.mxu0 0.0
    %286 = vmatpush1.msra.mxu0 %v261
    %287 = vmatprep.subr.mxu0 0.0
    %288 = vmatpush1.msra.mxu0 %v262
    %289 = vmatprep.subr.mxu0 0.0
    %290 = vmatpush1.msra.mxu0 %v263
    %291 = vmatprep.subr.mxu0 0.0
    %292 = vmatpush1.msra.mxu0 %v264
    %293 = vmatprep.subr.mxu0 0.0
    %294 = vmatpush1.msra.mxu0 %v265
    %295 = vmatprep.subr.mxu0 0.0
    %296 = vmatpush1.msra.mxu0 %v266
    %297 = vmatprep.subr.mxu0 0.0
    %298 = vmatpush1.msra.mxu0 %v267
    %299 = vmatprep.subr.mxu0 0.0
    %300 = vmatpush1.msra.mxu0 %v268
    %301 = vmatprep.subr.mxu0 0.0
    %302 = vmatpush1.msra.mxu0 %v269
    %303 = vmatprep.subr.mxu0 0.0
    %304 = vmatpush1.msra.mxu0 %v270
    %305 = vmatprep.subr.mxu0 0.0
    %306 = vmatpush1.msra.mxu0 %v271
    %307 = vmatprep.subr.mxu0 0.0
    %308 = vmatpush1.msra.mxu0 %v272
    %309 = vmatprep.subr.mxu0 0.0
    %310 = vmatpush1.msra.mxu0 %v273
    %311 = vmatprep.subr.mxu0 0.0
    %312 = vmatpush1.msra.mxu0 %v274
    %313 = vmatprep.subr.mxu0 0.0
    %314 = vmatpush1.msra.mxu0 %v275
    %315 = vmatprep.subr.mxu0 0.0
    %316 = vmatpush1.msra.mxu0 0.0
    %317 = vmatprep.subr.mxu0 0.0
    %318 = vmatpush1.msra.mxu0 0.0
    %319 = vmatprep.subr.mxu0 0.0
    %320 = vmatpush1.msra.mxu0 0.0
    %321 = vmatprep.subr.mxu0 0.0
    %322 = vmatpush1.msra.mxu0 0.0
    %323 = vmatprep.subr.mxu0 0.0
    %324 = vmatpush1.msra.mxu0 0.0
    %325 = vmatprep.subr.mxu0 0.0
    %326 = vmatpush1.msra.mxu0 0.0
    %327 = vmatprep.subr.mxu0 0.0
    %328 = vmatpush1.msra.mxu0 0.0
    %329 = vmatprep.subr.mxu0 0.0
    %330 = vmatpush1.msra.mxu0 0.0
    %331 = vmatprep.subr.mxu0 0.0
    %332 = vmatpush1.msra.mxu0 0.0
    %333 = vmatprep.subr.mxu0 0.0
    %334 = vmatpush1.msra.mxu0 0.0
    %335 = vmatprep.subr.mxu0 0.0
    %336 = vmatpush1.msra.mxu0 0.0
    %337 = vmatprep.subr.mxu0 0.0
    %338 = vmatpush1.msra.mxu0 0.0
    %339 = vmatprep.subr.mxu0 0.0
    %340 = vmatpush1.msra.mxu0 0.0
    %341 = vmatprep.subr.mxu0 0.0
    %342 = vmatpush1.msra.mxu0 0.0
    %343 = vmatprep.subr.mxu0 0.0
    %344 = vmatpush1.msra.mxu0 0.0
    %345 = vmatprep.subr.mxu0 0.0
    %346 = vmatpush1.msra.mxu0 0.0
    %347 = vmatprep.mubr.f32.mxu0 0.0
    %348 = vmatmul.mubr.f32.gmra.mrb[0].mxu0 %v259
    %v349 = vpop.f32.mrb[0].mxu0
    %v350 = vadd.f32 %v281, %v349
    %v351 = vpop.f32.mrb[0].mxu0
    %352 = vdwg.mxu0
    %353 = vst [vmem:[#allocation10] sm:$0xff] %v350
    // Predicated region
    $region46: #{tpu_custom_call.1} parent=1 // pred_check
      _
    $region47: #{tpu_custom_call.1} parent=1 // pred_check_branch
      %355 = sbr.rel (0) target = $region49
    $region48: #{tpu_custom_call.1} parent=1 // pred_region
      %s357 = ssub.s32 128, 128
      %358 = vsyncadd [#allocation4], %s357
      %s360 = sshll.u32 [#allocation10], 4
      %s361 = int_to_ptr.vmem [resolvable:$true] %s360
      %363 = dma.vmem_to_hbm [thread:$0]  %s361, 128, %s7, [#allocation4]
    $region49: #{tpu_custom_call.1} parent=1 // pred_fallthru
      _
    // Predicated region
    $region50: #{tpu_custom_call.1} parent=1 // pred_check
      _
    $region51: #{tpu_custom_call.1} parent=1 // pred_check_branch
      %365 = sbr.rel (0) target = $region53
    $region52: #{tpu_custom_call.1} parent=1 // pred_region
      %366 = dma.done [#allocation4], 128
    $region53: #{tpu_custom_call.1} parent=1 // pred_fallthru
      _
    %367 = vsyncpa [#allocation3], 1
    %368 = vsyncpa [#allocation6], 1
    %369 = vsyncpa [#allocation9], 1
    %370 = vsyncpa [#allocation4], 1

</llo_original>
